<compile_context>
chip_gen: v7x
topology: tpu7x:2x2x1
jax: 0.10.0
libtpu: 0.0.40
codegen_flags: <defaults>
</compile_context>

<pallas_src>
import jax
import jax.numpy as jnp
import numpy as np
from jax import lax
from jax.experimental import pallas as pl
from jax.experimental.pallas import tpu as pltpu


def _maybe_cast(x, dtype):
    return x if x.dtype == dtype else x.astype(dtype)


def _make_kernel(scale, bb, mxu_dtype):
    """Kernel over a (bb, S, E) block of each of xq/xk/xv; bb is a small static unroll."""

    def head_attn_kernel(xq_ref, xk_ref, xv_ref, wt_ref, b_ref, o_ref):
        wt = _maybe_cast(wt_ref[...], mxu_dtype)   # (E, L) pre-transposed weight
        b = b_ref[...]                             # (1, L) bias (kept f32)

        for i in range(bb):                        # tiny static unroll (bb capped in wrapper)
            # Projections (all through linearQ, matching the reference module).
            q = jnp.dot(_maybe_cast(xq_ref[i], mxu_dtype), wt,
                        preferred_element_type=jnp.float32) + b      # (Sq, L)
            k = jnp.dot(_maybe_cast(xk_ref[i], mxu_dtype), wt,
                        preferred_element_type=jnp.float32) + b      # (Sk, L)
            v = jnp.dot(_maybe_cast(xv_ref[i], mxu_dtype), wt,
                        preferred_element_type=jnp.float32) + b      # (Sk, L)

            # scores = (Q @ K^T) * scale without materializing a transposed K.
            scores = lax.dot_general(
                _maybe_cast(q, mxu_dtype), _maybe_cast(k, mxu_dtype),
                (((1,), (1,)), ((), ())),
                preferred_element_type=jnp.float32) * scale          # (Sq, Sk)

            # Numerically-stable softmax, exact fp32 (no approx reciprocal).
            m = jnp.max(scores, axis=-1, keepdims=True)
            e = jnp.exp(scores - m)
            probs = e / jnp.sum(e, axis=-1, keepdims=True)           # (Sq, Sk)

            out = jnp.dot(_maybe_cast(probs, mxu_dtype), _maybe_cast(v, mxu_dtype),
                          preferred_element_type=jnp.float32)        # (Sq, L)
            # TODO(synk): output last dim L=16 < 128 lanes -> masked stores; fuse
            # multiple heads per call (out dim H*L >= 128) for a lane-dense store.
            o_ref[i] = out.astype(o_ref.dtype)

    return head_attn_kernel


def _tensorcores_per_device():
    """Core count of device 0; falls back to 1 (collapsed grid is correct everywhere)."""
    try:
        dev = jax.devices()[0]
        for attr in ("num_cores", "core_count", "num_tensorcores"):
            v = getattr(dev, attr, None)
            if isinstance(v, int) and v > 0:
                return v
    except Exception:
        pass
    return 1


def _cap_block_batch(B, Sq, Sk, E, L, *, budget_bytes=4 << 20, max_unroll=8):
    """Largest divisor of B that keeps the (double-buffered) f32 blocks under a
    conservative VMEM budget (v5e default scoped VMEM is only 16 MiB) and keeps
    the in-kernel static unroll small."""
    per_batch = 4 * ((Sq + 2 * Sk) * E + Sq * L)        # input + output block bytes / batch
    cap = max(1, min(max_unroll, budget_bytes // (2 * per_batch)))
    bb = 1
    for d in range(1, B + 1):
        if B % d == 0 and d <= cap:
            bb = d
    return bb


def head_attention(xq, xk, xv, wq, bq, scale, *, attn_mask=None,
                   collapse_batch=None, mxu_dtype=jnp.float32):
    if attn_mask is not None:
        # TODO(synk): wire the masked_fill(-inf) path (pass the mask as a 4th
        # VMEM input and apply jnp.where before the softmax).
        raise NotImplementedError("attn_mask is not supported by this Pallas kernel yet")

    B, Sq, E = xq.shape
    Bk, Sk, Ek = xk.shape
    assert Bk == B and Ek == E and xv.shape == xk.shape, "xq/xk/xv shape mismatch"
    L, E_w = wq.shape
    assert E_w == E and bq.shape == (L,), "weight/bias shape mismatch"

    # One-time, tiny XLA-side layout prep (no per-step cost, no HBM round trip
    # of the activations).
    wt = jnp.asarray(wq).T                # (E, L)
    b2 = jnp.asarray(bq).reshape(1, L)    # (1, L)

    if collapse_batch is None:
        # Single-TC chips (v5e/v6e): collapse the batch into one grid step to
        # avoid per-step pipeline overhead.  Multi-TC (v7x megacore): keep batch
        # as a parallel grid axis so both cores stay busy.
        collapse_batch = _tensorcores_per_device() <= 1
        # TODO(synk): on multi-TC chips with B == 1 (or odd B), add a parallel
        # Sq-tile grid axis instead, once Sq is large enough to tile.

    bb = _cap_block_batch(B, Sq, Sk, E, L) if collapse_batch else 1
    grid = (B // bb,)
    sem = ("arbitrary",) if bb == B else ("parallel",)

    kernel = _make_kernel(float(scale), bb, mxu_dtype)
    return pl.pallas_call(
        kernel,
        out_shape=jax.ShapeDtypeStruct((B, Sq, L), xq.dtype),
        grid_spec=pltpu.PrefetchScalarGridSpec(
            num_scalar_prefetch=0,
            grid=grid,
            in_specs=[
                pl.BlockSpec((bb, Sq, E), lambda i: (i, 0, 0)),   # xq
                pl.BlockSpec((bb, Sk, E), lambda i: (i, 0, 0)),   # xk
                pl.BlockSpec((bb, Sk, E), lambda i: (i, 0, 0)),   # xv
                pl.BlockSpec((E, L), lambda i: (0, 0)),           # W^T (resident)
                pl.BlockSpec((1, L), lambda i: (0, 0)),           # bias (resident)
            ],
            out_specs=pl.BlockSpec((bb, Sq, L), lambda i: (i, 0, 0)),
        ),
        compiler_params=pltpu.CompilerParams(dimension_semantics=sem),
    )(xq, xk, xv, wt, b2)


def head_attention_ref(xq, xk, xv, wq, bq, scale):
    """Exact host-side (float64 numpy) reference of the PyTorch forward."""
    xq, xk, xv, wq, bq = (np.asarray(a, dtype=np.float64) for a in (xq, xk, xv, wq, bq))
    q = xq @ wq.T + bq
    k = xk @ wq.T + bq
    v = xv @ wq.T + bq
    scores = np.einsum("bqd,bkd->bqk", q, k) * scale
    scores = scores - scores.max(axis=-1, keepdims=True)
    e = np.exp(scores)
    probs = e / e.sum(axis=-1, keepdims=True)
    return np.einsum("bqk,bkd->bqd", probs, v)


if __name__ == "__main__":
    # Small shapes consistent with the module: B=2, seq=8, embed_dim=32, laten_dim=16.
    B, S, E, L = 2, 8, 32, 16
    scale = float(L) ** (-0.5)

    key = jax.random.PRNGKey(0)
    k_xq, k_xk, k_xv, k_wq, k_bq = jax.random.split(key, 5)

    xq = jax.random.normal(k_xq, (B, S, E), dtype=jnp.float32)
    xk = jax.random.normal(k_xk, (B, S, E), dtype=jnp.float32)
    xv = jax.random.normal(k_xv, (B, S, E), dtype=jnp.float32)

    # Deterministic parameter init for linearQ (the only params used in forward).
    bound = 1.0 / np.sqrt(E)
    wq = jax.random.uniform(k_wq, (L, E), jnp.float32, -bound, bound)
    bq = jax.random.uniform(k_bq, (L,), jnp.float32, -bound, bound)

    ref = head_attention_ref(xq, xk, xv, wq, bq, scale)

    # Exact-softmax fp32 path: tight tolerance (only MXU multi-pass f32 rounding
    # and EUP exp rounding remain).
    RTOL = ATOL = 1e-4

    # Exercise both grid layouts (collapsed single-step and per-batch parallel);
    # both are correct on any TPU generation, only perf differs.
    for collapse in (True, False):
        out = head_attention(xq, xk, xv, wq, bq, scale, collapse_batch=collapse)
        out = jax.block_until_ready(out)
        np.testing.assert_allclose(np.asarray(out, dtype=np.float64), ref,
                                   rtol=RTOL, atol=ATOL)

    # Auto (core-count-aware) path — what a caller would normally use.
    out = jax.block_until_ready(head_attention(xq, xk, xv, wq, bq, scale))
    np.testing.assert_allclose(np.asarray(out, dtype=np.float64), ref,
                               rtol=RTOL, atol=ATOL)

    print("KERNEL_OK")
</pallas_src>

<mosaic_0001>
module attributes {stable_mosaic.version = 11 : i64} {
  func.func @head_attn_kernel(%arg0: i32, %arg1: memref<2x8x32xf32, #tpu.memory_space<vmem>>, %arg2: memref<2x8x32xf32, #tpu.memory_space<vmem>>, %arg3: memref<2x8x32xf32, #tpu.memory_space<vmem>>, %arg4: memref<32x16xf32, #tpu.memory_space<vmem>>, %arg5: memref<1x16xf32, #tpu.memory_space<vmem>>, %arg6: memref<2x8x16xf32, #tpu.memory_space<vmem>>) attributes {dimension_semantics = [#tpu.dimension_semantics<arbitrary>], iteration_bounds = array<i64: 1>, scalar_prefetch = 0 : i64, scratch_operands = 0 : i64, tpu.core_type = #tpu.core_type<tc>, window_params = [{transform_indices = @transform_0, window_bounds = array<i64: 2, 8, 32>}, {transform_indices = @transform_1, window_bounds = array<i64: 2, 8, 32>}, {transform_indices = @transform_2, window_bounds = array<i64: 2, 8, 32>}, {pipeline_mode = #tpu.pipeline_mode<synchronous>, transform_indices = @transform_3, window_bounds = array<i64: 32, 16>}, {pipeline_mode = #tpu.pipeline_mode<synchronous>, transform_indices = @transform_4, window_bounds = array<i64: 1, 16>}, {transform_indices = @transform_5, window_bounds = array<i64: 2, 8, 16>}]} {
    %c0 = arith.constant 0 : index
    %c0_0 = arith.constant 0 : index
    %0 = vector.load %arg4[%c0, %c0_0] : memref<32x16xf32, #tpu.memory_space<vmem>>, vector<32x16xf32>
    %c0_1 = arith.constant 0 : index
    %c0_2 = arith.constant 0 : index
    %1 = vector.load %arg5[%c0_1, %c0_2] : memref<1x16xf32, #tpu.memory_space<vmem>>, vector<1x16xf32>
    %c0_3 = arith.constant 0 : index
    %c0_4 = arith.constant 0 : index
    %c0_5 = arith.constant 0 : index
    %2 = vector.load %arg1[%c0_3, %c0_4, %c0_5] : memref<2x8x32xf32, #tpu.memory_space<vmem>>, vector<1x8x32xf32>
    %3 = vector.shape_cast %2 : vector<1x8x32xf32> to vector<8x32xf32>
    %cst = arith.constant dense<0.000000e+00> : vector<8x16xf32>
    %4 = tpu.matmul %3, %0, %cst {dimension_numbers = #tpu.dot_dimension_numbers<[1], [0], [0], [1], [0, 0, 1, 1], [], []>} : vector<8x32xf32>, vector<32x16xf32>, vector<8x16xf32> -> vector<8x16xf32>
    %5 = vector.broadcast %1 : vector<1x16xf32> to vector<8x16xf32>
    %6 = arith.addf %4, %5 : vector<8x16xf32>
    %c0_6 = arith.constant 0 : index
    %c0_7 = arith.constant 0 : index
    %c0_8 = arith.constant 0 : index
    %7 = vector.load %arg2[%c0_6, %c0_7, %c0_8] : memref<2x8x32xf32, #tpu.memory_space<vmem>>, vector<1x8x32xf32>
    %8 = vector.shape_cast %7 : vector<1x8x32xf32> to vector<8x32xf32>
    %cst_9 = arith.constant dense<0.000000e+00> : vector<8x16xf32>
    %9 = tpu.matmul %8, %0, %cst_9 {dimension_numbers = #tpu.dot_dimension_numbers<[1], [0], [0], [1], [0, 0, 1, 1], [], []>} : vector<8x32xf32>, vector<32x16xf32>, vector<8x16xf32> -> vector<8x16xf32>
    %10 = vector.broadcast %1 : vector<1x16xf32> to vector<8x16xf32>
    %11 = arith.addf %9, %10 : vector<8x16xf32>
    %c0_10 = arith.constant 0 : index
    %c0_11 = arith.constant 0 : index
    %c0_12 = arith.constant 0 : index
    %12 = vector.load %arg3[%c0_10, %c0_11, %c0_12] : memref<2x8x32xf32, #tpu.memory_space<vmem>>, vector<1x8x32xf32>
    %13 = vector.shape_cast %12 : vector<1x8x32xf32> to vector<8x32xf32>
    %cst_13 = arith.constant dense<0.000000e+00> : vector<8x16xf32>
    %14 = tpu.matmul %13, %0, %cst_13 {dimension_numbers = #tpu.dot_dimension_numbers<[1], [0], [0], [1], [0, 0, 1, 1], [], []>} : vector<8x32xf32>, vector<32x16xf32>, vector<8x16xf32> -> vector<8x16xf32>
    %15 = vector.broadcast %1 : vector<1x16xf32> to vector<8x16xf32>
    %16 = arith.addf %14, %15 : vector<8x16xf32>
    %cst_14 = arith.constant dense<0.000000e+00> : vector<8x8xf32>
    %17 = tpu.matmul %6, %11, %cst_14 {dimension_numbers = #tpu.dot_dimension_numbers<[1], [1], [0], [0], [0, 0, 1, 0], [], []>} : vector<8x16xf32>, vector<8x16xf32>, vector<8x8xf32> -> vector<8x8xf32>
    %cst_15 = arith.constant 2.500000e-01 : f32
    %18 = vector.broadcast %cst_15 : f32 to vector<8x8xf32>
    %19 = arith.mulf %17, %18 : vector<8x8xf32>
    %cst_16 = arith.constant dense<0xFF800000> : vector<8xf32>
    %20 = vector.multi_reduction <maximumf>, %19, %cst_16 [1] : vector<8x8xf32> to vector<8xf32>
    %21 = vector.shape_cast %20 : vector<8xf32> to vector<8x1xf32>
    %22 = vector.broadcast %21 : vector<8x1xf32> to vector<8x8xf32>
    %23 = arith.subf %19, %22 : vector<8x8xf32>
    %24 = math.exp %23 : vector<8x8xf32>
    %cst_17 = arith.constant dense<0.000000e+00> : vector<8xf32>
    %25 = vector.multi_reduction <add>, %24, %cst_17 [1] : vector<8x8xf32> to vector<8xf32>
    %26 = vector.shape_cast %25 : vector<8xf32> to vector<8x1xf32>
    %27 = vector.broadcast %26 : vector<8x1xf32> to vector<8x8xf32>
    %28 = arith.divf %24, %27 : vector<8x8xf32>
    %cst_18 = arith.constant dense<0.000000e+00> : vector<8x16xf32>
    %29 = tpu.matmul %28, %16, %cst_18 {dimension_numbers = #tpu.dot_dimension_numbers<[1], [0], [0], [1], [0, 0, 1, 1], [], []>} : vector<8x8xf32>, vector<8x16xf32>, vector<8x16xf32> -> vector<8x16xf32>
    %c0_19 = arith.constant 0 : index
    %c0_20 = arith.constant 0 : index
    %c0_21 = arith.constant 0 : index
    %30 = vector.load %arg6[%c0_19, %c0_20, %c0_21] : memref<2x8x16xf32, #tpu.memory_space<vmem>>, vector<1x8x16xf32>
    %31 = vector.shape_cast %30 : vector<1x8x16xf32> to vector<8x16xf32>
    %32 = vector.shape_cast %29 : vector<8x16xf32> to vector<1x8x16xf32>
    tpu.vector_store %arg6[%c0_19, %c0_20, %c0_21], %32 {strides = array<i32>} : memref<2x8x16xf32, #tpu.memory_space<vmem>>, vector<1x8x16xf32>,
    %c1 = arith.constant 1 : index
    %c0_22 = arith.constant 0 : index
    %c0_23 = arith.constant 0 : index
    %33 = vector.load %arg1[%c1, %c0_22, %c0_23] : memref<2x8x32xf32, #tpu.memory_space<vmem>>, vector<1x8x32xf32>
    %34 = vector.shape_cast %33 : vector<1x8x32xf32> to vector<8x32xf32>
    %cst_24 = arith.constant dense<0.000000e+00> : vector<8x16xf32>
    %35 = tpu.matmul %34, %0, %cst_24 {dimension_numbers = #tpu.dot_dimension_numbers<[1], [0], [0], [1], [0, 0, 1, 1], [], []>} : vector<8x32xf32>, vector<32x16xf32>, vector<8x16xf32> -> vector<8x16xf32>
    %36 = vector.broadcast %1 : vector<1x16xf32> to vector<8x16xf32>
    %37 = arith.addf %35, %36 : vector<8x16xf32>
    %c1_25 = arith.constant 1 : index
    %c0_26 = arith.constant 0 : index
    %c0_27 = arith.constant 0 : index
    %38 = vector.load %arg2[%c1_25, %c0_26, %c0_27] : memref<2x8x32xf32, #tpu.memory_space<vmem>>, vector<1x8x32xf32>
    %39 = vector.shape_cast %38 : vector<1x8x32xf32> to vector<8x32xf32>
    %cst_28 = arith.constant dense<0.000000e+00> : vector<8x16xf32>
    %40 = tpu.matmul %39, %0, %cst_28 {dimension_numbers = #tpu.dot_dimension_numbers<[1], [0], [0], [1], [0, 0, 1, 1], [], []>} : vector<8x32xf32>, vector<32x16xf32>, vector<8x16xf32> -> vector<8x16xf32>
    %41 = vector.broadcast %1 : vector<1x16xf32> to vector<8x16xf32>
    %42 = arith.addf %40, %41 : vector<8x16xf32>
    %c1_29 = arith.constant 1 : index
    %c0_30 = arith.constant 0 : index
    %c0_31 = arith.constant 0 : index
    %43 = vector.load %arg3[%c1_29, %c0_30, %c0_31] : memref<2x8x32xf32, #tpu.memory_space<vmem>>, vector<1x8x32xf32>
    %44 = vector.shape_cast %43 : vector<1x8x32xf32> to vector<8x32xf32>
    %cst_32 = arith.constant dense<0.000000e+00> : vector<8x16xf32>
    %45 = tpu.matmul %44, %0, %cst_32 {dimension_numbers = #tpu.dot_dimension_numbers<[1], [0], [0], [1], [0, 0, 1, 1], [], []>} : vector<8x32xf32>, vector<32x16xf32>, vector<8x16xf32> -> vector<8x16xf32>
    %46 = vector.broadcast %1 : vector<1x16xf32> to vector<8x16xf32>
    %47 = arith.addf %45, %46 : vector<8x16xf32>
    %cst_33 = arith.constant dense<0.000000e+00> : vector<8x8xf32>
    %48 = tpu.matmul %37, %42, %cst_33 {dimension_numbers = #tpu.dot_dimension_numbers<[1], [1], [0], [0], [0, 0, 1, 0], [], []>} : vector<8x16xf32>, vector<8x16xf32>, vector<8x8xf32> -> vector<8x8xf32>
    %cst_34 = arith.constant 2.500000e-01 : f32
    %49 = vector.broadcast %cst_34 : f32 to vector<8x8xf32>
    %50 = arith.mulf %48, %49 : vector<8x8xf32>
    %cst_35 = arith.constant dense<0xFF800000> : vector<8xf32>
    %51 = vector.multi_reduction <maximumf>, %50, %cst_35 [1] : vector<8x8xf32> to vector<8xf32>
    %52 = vector.shape_cast %51 : vector<8xf32> to vector<8x1xf32>
    %53 = vector.broadcast %52 : vector<8x1xf32> to vector<8x8xf32>
    %54 = arith.subf %50, %53 : vector<8x8xf32>
    %55 = math.exp %54 : vector<8x8xf32>
    %cst_36 = arith.constant dense<0.000000e+00> : vector<8xf32>
    %56 = vector.multi_reduction <add>, %55, %cst_36 [1] : vector<8x8xf32> to vector<8xf32>
    %57 = vector.shape_cast %56 : vector<8xf32> to vector<8x1xf32>
    %58 = vector.broadcast %57 : vector<8x1xf32> to vector<8x8xf32>
    %59 = arith.divf %55, %58 : vector<8x8xf32>
    %cst_37 = arith.constant dense<0.000000e+00> : vector<8x16xf32>
    %60 = tpu.matmul %59, %47, %cst_37 {dimension_numbers = #tpu.dot_dimension_numbers<[1], [0], [0], [1], [0, 0, 1, 1], [], []>} : vector<8x8xf32>, vector<8x16xf32>, vector<8x16xf32> -> vector<8x16xf32>
    %c1_38 = arith.constant 1 : index
    %c0_39 = arith.constant 0 : index
    %c0_40 = arith.constant 0 : index
    %61 = vector.load %arg6[%c1_38, %c0_39, %c0_40] : memref<2x8x16xf32, #tpu.memory_space<vmem>>, vector<1x8x16xf32>
    %62 = vector.shape_cast %61 : vector<1x8x16xf32> to vector<8x16xf32>
    %63 = vector.shape_cast %60 : vector<8x16xf32> to vector<1x8x16xf32>
    tpu.vector_store %arg6[%c1_38, %c0_39, %c0_40], %63 {strides = array<i32>} : memref<2x8x16xf32, #tpu.memory_space<vmem>>, vector<1x8x16xf32>,
    return
  }
  func.func @transform_0(%arg0: i32) -> (i32, i32, i32) {
    %c0_i32 = arith.constant 0 : i32
    %c0_i32_0 = arith.constant 0 : i32
    %c0_i32_1 = arith.constant 0 : i32
    return %arg0, %c0_i32, %c0_i32_0 : i32, i32, i32
  }
  func.func @transform_1(%arg0: i32) -> (i32, i32, i32) {
    %c0_i32 = arith.constant 0 : i32
    %c0_i32_0 = arith.constant 0 : i32
    %c0_i32_1 = arith.constant 0 : i32
    return %arg0, %c0_i32, %c0_i32_0 : i32, i32, i32
  }
  func.func @transform_2(%arg0: i32) -> (i32, i32, i32) {
    %c0_i32 = arith.constant 0 : i32
    %c0_i32_0 = arith.constant 0 : i32
    %c0_i32_1 = arith.constant 0 : i32
    return %arg0, %c0_i32, %c0_i32_0 : i32, i32, i32
  }
  func.func @transform_3(%arg0: i32) -> (i32, i32) {
    %c0_i32 = arith.constant 0 : i32
    %c0_i32_0 = arith.constant 0 : i32
    %c0_i32_1 = arith.constant 0 : i32
    return %c0_i32, %c0_i32_0 : i32, i32
  }
  func.func @transform_4(%arg0: i32) -> (i32, i32) {
    %c0_i32 = arith.constant 0 : i32
    %c0_i32_0 = arith.constant 0 : i32
    %c0_i32_1 = arith.constant 0 : i32
    return %c0_i32, %c0_i32_0 : i32, i32
  }
  func.func @transform_5(%arg0: i32) -> (i32, i32, i32) {
    %c0_i32 = arith.constant 0 : i32
    %c0_i32_0 = arith.constant 0 : i32
    %c0_i32_1 = arith.constant 0 : i32
    return %arg0, %c0_i32, %c0_i32_0 : i32, i32, i32
  }
}

</mosaic_0001>

<llo_original>
// kernel: tpu_custom_call.1
$region0: #{tpu_custom_call.1}
  #allocation0 [shape = 'u32[]', space=smem, size = 0x4, offset = 0x4, fixed_abs, tag = 'smem constant byte address 0x4 - core index']
  #allocation1 [shape = 'u32[144,128]{1,0:T(1,128)}', space=vmem, size = 0x12000, scoped, tag = 'internal scratch']
  %s0 = inlined_call_operand.vmem [shape: f32[2,8,32], index: 0, kind: input, shape index: {}]
  %s1 = inlined_call_operand.vmem [shape: f32[2,8,32], index: 1, kind: input, shape index: {}]
  %s2 = inlined_call_operand.vmem [shape: f32[2,8,32], index: 2, kind: input, shape index: {}]
  %s3 = inlined_call_operand.vmem [shape: f32[32,16], index: 3, kind: input, shape index: {}]
  %s4 = inlined_call_operand.vmem [shape: f32[1,16], index: 4, kind: input, shape index: {}]
  %s5 = inlined_call_operand.hbm [shape: f32[2,8,16], index: 5, kind: output, shape index: {}]
  %s6 = sld [smem:[#allocation0]]
  $region30: #{tpu_custom_call.1} parent=0
    _
  %s8 = ssub.s32 1, %s6
  %s9 = scalar_select 0, %s8, %s6
  $region1: #{tpu_custom_call.1} parent=0
    #allocation2 [shape = 'u8[8192]{0}', space=vmem, size = 0x2000, scoped, tag = 'output window, operand 0, single buffered']
    #allocation3 [shape = 's32[1]{0}', space=sflag, size = 0x4, scoped, tag = 'scoped memory for tpu_custom_call.1']
    %10 = vsyncpa [#allocation3], 0
    // Predicated region
    $region2: #{tpu_custom_call.1} parent=1 // pred_check
      _
    $region3: #{tpu_custom_call.1} parent=1 // pred_check_branch
      %12 = sbr.rel (0) target = $region5
    $region4: #{tpu_custom_call.1} parent=1 // pred_region
      _
    $region5: #{tpu_custom_call.1} parent=1 // pred_fallthru
      _
    // Predicated region
    $region6: #{tpu_custom_call.1} parent=1 // pred_check
      _
    $region7: #{tpu_custom_call.1} parent=1 // pred_check_branch
      %14 = sbr.rel (0) target = $region9
    $region8: #{tpu_custom_call.1} parent=1 // pred_region
      _
    $region9: #{tpu_custom_call.1} parent=1 // pred_fallthru
      _
    // Predicated region
    $region10: #{tpu_custom_call.1} parent=1 // pred_check
      _
    $region11: #{tpu_custom_call.1} parent=1 // pred_check_branch
      %16 = sbr.rel (0) target = $region13
    $region12: #{tpu_custom_call.1} parent=1 // pred_region
      _
    $region13: #{tpu_custom_call.1} parent=1 // pred_fallthru
      _
    // Predicated region
    $region14: #{tpu_custom_call.1} parent=1 // pred_check
      _
    $region15: #{tpu_custom_call.1} parent=1 // pred_check_branch
      %18 = sbr.rel (0) target = $region17
    $region16: #{tpu_custom_call.1} parent=1 // pred_region
      _
    $region17: #{tpu_custom_call.1} parent=1 // pred_fallthru
      _
    // Predicated region
    $region18: #{tpu_custom_call.1} parent=1 // pred_check
      _
    $region19: #{tpu_custom_call.1} parent=1 // pred_check_branch
      %20 = sbr.rel (0) target = $region21
    $region20: #{tpu_custom_call.1} parent=1 // pred_region
      _
    $region21: #{tpu_custom_call.1} parent=1 // pred_fallthru
      _
    %v21 = vld [vmem:[%s3] sm:$0xff]
    %v22 = vld [vmem:[%s3 + $0x8] sm:$0xff]
    %v23 = vld [vmem:[%s3 + $0x10] sm:$0xff]
    %v24 = vld [vmem:[%s3 + $0x18] sm:$0xff]
    %v25 = vld [vmem:[%s4] sm:$0x1]
    %v26 = vld [vmem:[%s0] sm:$0xff]
    %v28 = vlaneseq
    %v29 = vshrl.u32 %v28, 7
    %v30 = vsub.s32 0, %v29
    %v31 = vrot.slane %v25, %v30
    %vm33 = vcmask 261120
    %v35 = vsel %vm33, %v26, 0
    %37 = vmatprep.subr.mxu0 0.0
    %38 = vmatpush1.msra.mxu0 %v21
    %39 = vmatprep.subr.mxu0 0.0
    %40 = vmatpush1.msra.mxu0 %v22
    %41 = vmatprep.subr.mxu0 0.0
    %42 = vmatpush1.msra.mxu0 %v23
    %43 = vmatprep.subr.mxu0 0.0
    %44 = vmatpush1.msra.mxu0 %v24
    %45 = vmatprep.subr.mxu0 0.0
    %46 = vmatpush1.msra.mxu0 0.0
    %47 = vmatprep.subr.mxu0 0.0
    %48 = vmatpush1.msra.mxu0 0.0
    %49 = vmatprep.subr.mxu0 0.0
    %50 = vmatpush1.msra.mxu0 0.0
    %51 = vmatprep.subr.mxu0 0.0
    %52 = vmatpush1.msra.mxu0 0.0
    %53 = vmatprep.subr.mxu0 0.0
    %54 = vmatpush1.msra.mxu0 0.0
    %55 = vmatprep.subr.mxu0 0.0
    %56 = vmatpush1.msra.mxu0 0.0
    %57 = vmatprep.subr.mxu0 0.0
    %58 = vmatpush1.msra.mxu0 0.0
    %59 = vmatprep.subr.mxu0 0.0
    %60 = vmatpush1.msra.mxu0 0.0
    %61 = vmatprep.subr.mxu0 0.0
    %62 = vmatpush1.msra.mxu0 0.0
    %63 = vmatprep.subr.mxu0 0.0
    %64 = vmatpush1.msra.mxu0 0.0
    %65 = vmatprep.subr.mxu0 0.0
    %66 = vmatpush1.msra.mxu0 0.0
    %67 = vmatprep.subr.mxu0 0.0
    %68 = vmatpush1.msra.mxu0 0.0
    %69 = vmatprep.subr.mxu0 0.0
    %70 = vmatpush1.msra.mxu0 0.0
    %71 = vmatprep.subr.mxu0 0.0
    %72 = vmatpush1.msra.mxu0 0.0
    %73 = vmatprep.subr.mxu0 0.0
    %74 = vmatpush1.msra.mxu0 0.0
    %75 = vmatprep.subr.mxu0 0.0
    %76 = vmatpush1.msra.mxu0 0.0
    %77 = vmatprep.subr.mxu0 0.0
    %78 = vmatpush1.msra.mxu0 0.0
    %79 = vmatprep.subr.mxu0 0.0
    %80 = vmatpush1.msra.mxu0 0.0
    %81 = vmatprep.subr.mxu0 0.0
    %82 = vmatpush1.msra.mxu0 0.0
    %83 = vmatprep.subr.mxu0 0.0
    %84 = vmatpush1.msra.mxu0 0.0
    %85 = vmatprep.subr.mxu0 0.0
    %86 = vmatpush1.msra.mxu0 0.0
    %87 = vmatprep.subr.mxu0 0.0
    %88 = vmatpush1.msra.mxu0 0.0
    %89 = vmatprep.subr.mxu0 0.0
    %90 = vmatpush1.msra.mxu0 0.0
    %91 = vmatprep.subr.mxu0 0.0
    %92 = vmatpush1.msra.mxu0 0.0
    %93 = vmatprep.subr.mxu0 0.0
    %94 = vmatpush1.msra.mxu0 0.0
    %95 = vmatprep.subr.mxu0 0.0
    %96 = vmatpush1.msra.mxu0 0.0
    %97 = vmatprep.subr.mxu0 0.0
    %98 = vmatpush1.msra.mxu0 0.0
    %99 = vmatprep.subr.mxu0 0.0
    %100 = vmatpush1.msra.mxu0 0.0
    %101 = vmatprep.mubr.f32.mxu0 0.0
    %102 = vmatmul.mubr.f32.gmra.mrb[0].mxu0 %v35
    %v103 = vpop.f32.mrb[0].mxu0
    %v104 = vadd.f32 %v31, %v103
    %v105 = vpop.f32.mrb[0].mxu0
    %106 = vdwg.mxu0
    %v107 = vld [vmem:[%s1] sm:$0xff]
    %v109 = vsel %vm33, %v107, 0
    %111 = vmatprep.subr.mxu0 0.0
    %112 = vmatpush1.msra.mxu0 %v21
    %113 = vmatprep.subr.mxu0 0.0
    %114 = vmatpush1.msra.mxu0 %v22
    %115 = vmatprep.subr.mxu0 0.0
    %116 = vmatpush1.msra.mxu0 %v23
    %117 = vmatprep.subr.mxu0 0.0
    %118 = vmatpush1.msra.mxu0 %v24
    %119 = vmatprep.subr.mxu0 0.0
    %120 = vmatpush1.msra.mxu0 0.0
    %121 = vmatprep.subr.mxu0 0.0
    %122 = vmatpush1.msra.mxu0 0.0
    %123 = vmatprep.subr.mxu0 0.0
    %124 = vmatpush1.msra.mxu0 0.0
    %125 = vmatprep.subr.mxu0 0.0
    %126 = vmatpush1.msra.mxu0 0.0
    %127 = vmatprep.subr.mxu0 0.0
    %128 = vmatpush1.msra.mxu0 0.0
    %129 = vmatprep.subr.mxu0 0.0
    %130 = vmatpush1.msra.mxu0 0.0
    %131 = vmatprep.subr.mxu0 0.0
    %132 = vmatpush1.msra.mxu0 0.0
    %133 = vmatprep.subr.mxu0 0.0
    %134 = vmatpush1.msra.mxu0 0.0
    %135 = vmatprep.subr.mxu0 0.0
    %136 = vmatpush1.msra.mxu0 0.0
    %137 = vmatprep.subr.mxu0 0.0
    %138 = vmatpush1.msra.mxu0 0.0
    %139 = vmatprep.subr.mxu0 0.0
    %140 = vmatpush1.msra.mxu0 0.0
    %141 = vmatprep.subr.mxu0 0.0
    %142 = vmatpush1.msra.mxu0 0.0
    %143 = vmatprep.subr.mxu0 0.0
    %144 = vmatpush1.msra.mxu0 0.0
    %145 = vmatprep.subr.mxu0 0.0
    %146 = vmatpush1.msra.mxu0 0.0
    %147 = vmatprep.subr.mxu0 0.0
    %148 = vmatpush1.msra.mxu0 0.0
    %149 = vmatprep.subr.mxu0 0.0
    %150 = vmatpush1.msra.mxu0 0.0
    %151 = vmatprep.subr.mxu0 0.0
    %152 = vmatpush1.msra.mxu0 0.0
    %153 = vmatprep.subr.mxu0 0.0
    %154 = vmatpush1.msra.mxu0 0.0
    %155 = vmatprep.subr.mxu0 0.0
    %156 = vmatpush1.msra.mxu0 0.0
    %157 = vmatprep.subr.mxu0 0.0
    %158 = vmatpush1.msra.mxu0 0.0
    %159 = vmatprep.subr.mxu0 0.0
    %160 = vmatpush1.msra.mxu0 0.0
    %161 = vmatprep.subr.mxu0 0.0
    %162 = vmatpush1.msra.mxu0 0.0
    %163 = vmatprep.subr.mxu0 0.0
    %164 = vmatpush1.msra.mxu0 0.0
    %165 = vmatprep.subr.mxu0 0.0
    %166 = vmatpush1.msra.mxu0 0.0
    %167 = vmatprep.subr.mxu0 0.0
    %168 = vmatpush1.msra.mxu0 0.0
    %169 = vmatprep.subr.mxu0 0.0
    %170 = vmatpush1.msra.mxu0 0.0
    %171 = vmatprep.subr.mxu0 0.0
    %172 = vmatpush1.msra.mxu0 0.0
    %173 = vmatprep.subr.mxu0 0.0
    %174 = vmatpush1.msra.mxu0 0.0
    %175 = vmatprep.mubr.f32.mxu0 0.0
    %176 = vmatmul.mubr.f32.gmra.mrb[0].mxu0 %v109
    %v177 = vpop.f32.mrb[0].mxu0
    %v178 = vadd.f32 %v31, %v177
    %v179 = vpop.f32.mrb[0].mxu0
    %180 = vdwg.mxu0
    %v181 = vld [vmem:[%s2] sm:$0xff]
    %v183 = vsel %vm33, %v181, 0
    %185 = vmatprep.subr.mxu0 0.0
    %186 = vmatpush1.msra.mxu0 %v21
    %187 = vmatprep.subr.mxu0 0.0
    %188 = vmatpush1.msra.mxu0 %v22
    %189 = vmatprep.subr.mxu0 0.0
    %190 = vmatpush1.msra.mxu0 %v23
    %191 = vmatprep.subr.mxu0 0.0
    %192 = vmatpush1.msra.mxu0 %v24
    %193 = vmatprep.subr.mxu0 0.0
    %194 = vmatpush1.msra.mxu0 0.0
    %195 = vmatprep.subr.mxu0 0.0
    %196 = vmatpush1.msra.mxu0 0.0
    %197 = vmatprep.subr.mxu0 0.0
    %198 = vmatpush1.msra.mxu0 0.0
    %199 = vmatprep.subr.mxu0 0.0
    %200 = vmatpush1.msra.mxu0 0.0
    %201 = vmatprep.subr.mxu0 0.0
    %202 = vmatpush1.msra.mxu0 0.0
    %203 = vmatprep.subr.mxu0 0.0
    %204 = vmatpush1.msra.mxu0 0.0
    %205 = vmatprep.subr.mxu0 0.0
    %206 = vmatpush1.msra.mxu0 0.0
    %207 = vmatprep.subr.mxu0 0.0
    %208 = vmatpush1.msra.mxu0 0.0
    %209 = vmatprep.subr.mxu0 0.0
    %210 = vmatpush1.msra.mxu0 0.0
    %211 = vmatprep.subr.mxu0 0.0
    %212 = vmatpush1.msra.mxu0 0.0
    %213 = vmatprep.subr.mxu0 0.0
    %214 = vmatpush1.msra.mxu0 0.0
    %215 = vmatprep.subr.mxu0 0.0
    %216 = vmatpush1.msra.mxu0 0.0
    %217 = vmatprep.subr.mxu0 0.0
    %218 = vmatpush1.msra.mxu0 0.0
    %219 = vmatprep.subr.mxu0 0.0
    %220 = vmatpush1.msra.mxu0 0.0
    %221 = vmatprep.subr.mxu0 0.0
    %222 = vmatpush1.msra.mxu0 0.0
    %223 = vmatprep.subr.mxu0 0.0
    %224 = vmatpush1.msra.mxu0 0.0
    %225 = vmatprep.subr.mxu0 0.0
    %226 = vmatpush1.msra.mxu0 0.0
    %227 = vmatprep.subr.mxu0 0.0
    %228 = vmatpush1.msra.mxu0 0.0
    %229 = vmatprep.subr.mxu0 0.0
    %230 = vmatpush1.msra.mxu0 0.0
    %231 = vmatprep.subr.mxu0 0.0
    %232 = vmatpush1.msra.mxu0 0.0
    %233 = vmatprep.subr.mxu0 0.0
    %234 = vmatpush1.msra.mxu0 0.0
    %235 = vmatprep.subr.mxu0 0.0
    %236 = vmatpush1.msra.mxu0 0.0
    %237 = vmatprep.subr.mxu0 0.0
    %238 = vmatpush1.msra.mxu0 0.0
    %239 = vmatprep.subr.mxu0 0.0
    %240 = vmatpush1.msra.mxu0 0.0
    %241 = vmatprep.subr.mxu0 0.0
    %242 = vmatpush1.msra.mxu0 0.0
    %243 = vmatprep.subr.mxu0 0.0
    %244 = vmatpush1.msra.mxu0 0.0
    %245 = vmatprep.subr.mxu0 0.0
    %246 = vmatpush1.msra.mxu0 0.0
    %247 = vmatprep.subr.mxu0 0.0
    %248 = vmatpush1.msra.mxu0 0.0
    %249 = vmatprep.mubr.f32.mxu0 0.0
    %250 = vmatmul.mubr.f32.gmra.mrb[0].mxu0 %v183
    %v251 = vpop.f32.mrb[0].mxu0
    %v252 = vadd.f32 %v31, %v251
    %v253 = vpop.f32.mrb[0].mxu0
    %254 = vdwg.mxu0
    %vm255 = vcmask 130048
    %v257 = vsel %vm255, %v104, 0
    %v260 = vsel %vm255, %v178, 0
    %262 = vmatprep.subr.mxu0 0.0
    %263 = vmatpush1.xpose.msra.mxu0 %v260
    %264 = vmatprep.subr.mxu0 0.0
    %265 = vmatpush1.xpose.msra.mxu0 0.0
    %266 = vmatprep.subr.mxu0 0.0
    %267 = vmatpush1.xpose.msra.mxu0 0.0
    %268 = vmatprep.subr.mxu0 0.0
    %269 = vmatpush1.xpose.msra.mxu0 0.0
    %270 = vmatprep.subr.mxu0 0.0
    %271 = vmatpush1.xpose.msra.mxu0 0.0
    %272 = vmatprep.subr.mxu0 0.0
    %273 = vmatpush1.xpose.msra.mxu0 0.0
    %274 = vmatprep.subr.mxu0 0.0
    %275 = vmatpush1.xpose.msra.mxu0 0.0
    %276 = vmatprep.subr.mxu0 0.0
    %277 = vmatpush1.xpose.msra.mxu0 0.0
    %278 = vmatprep.subr.mxu0 0.0
    %279 = vmatpush1.xpose.msra.mxu0 0.0
    %280 = vmatprep.subr.mxu0 0.0
    %281 = vmatpush1.xpose.msra.mxu0 0.0
    %282 = vmatprep.subr.mxu0 0.0
    %283 = vmatpush1.xpose.msra.mxu0 0.0
    %284 = vmatprep.subr.mxu0 0.0
    %285 = vmatpush1.xpose.msra.mxu0 0.0
    %286 = vmatprep.subr.mxu0 0.0
    %287 = vmatpush1.xpose.msra.mxu0 0.0
    %288 = vmatprep.subr.mxu0 0.0
    %289 = vmatpush1.xpose.msra.mxu0 0.0
    %290 = vmatprep.subr.mxu0 0.0
    %291 = vmatpush1.xpose.msra.mxu0 0.0
    %292 = vmatprep.subr.mxu0 0.0
    %293 = vmatpush1.xpose.msra.mxu0 0.0
    %294 = vmatprep.subr.mxu0 0.0
    %295 = vmatpush1.xpose.msra.mxu0 0.0
    %296 = vmatprep.subr.mxu0 0.0
    %297 = vmatpush1.xpose.msra.mxu0 0.0
    %298 = vmatprep.subr.mxu0 0.0
    %299 = vmatpush1.xpose.msra.mxu0 0.0
    %300 = vmatprep.subr.mxu0 0.0
    %301 = vmatpush1.xpose.msra.mxu0 0.0
    %302 = vmatprep.subr.mxu0 0.0
    %303 = vmatpush1.xpose.msra.mxu0 0.0
    %304 = vmatprep.subr.mxu0 0.0
    %305 = vmatpush1.xpose.msra.mxu0 0.0
    %306 = vmatprep.subr.mxu0 0.0
    %307 = vmatpush1.xpose.msra.mxu0 0.0
    %308 = vmatprep.subr.mxu0 0.0
    %309 = vmatpush1.xpose.msra.mxu0 0.0
    %310 = vmatprep.subr.mxu0 0.0
    %311 = vmatpush1.xpose.msra.mxu0 0.0
    %312 = vmatprep.subr.mxu0 0.0
    %313 = vmatpush1.xpose.msra.mxu0 0.0
    %314 = vmatprep.subr.mxu0 0.0
    %315 = vmatpush1.xpose.msra.mxu0 0.0
    %316 = vmatprep.subr.mxu0 0.0
    %317 = vmatpush1.xpose.msra.mxu0 0.0
    %318 = vmatprep.subr.mxu0 0.0
    %319 = vmatpush1.xpose.msra.mxu0 0.0
    %320 = vmatprep.subr.mxu0 0.0
    %321 = vmatpush1.xpose.msra.mxu0 0.0
    %322 = vmatprep.subr.mxu0 0.0
    %323 = vmatpush1.xpose.msra.mxu0 0.0
    %324 = vmatprep.subr.mxu0 0.0
    %325 = vmatpush1.xpose.msra.mxu0 0.0
    %326 = vmatprep.mubr.f32.mxu0 0.0
    %327 = vmatmul.mubr.f32.gmra.mrb[0].mxu0 %v257
    %v328 = vpop.f32.mrb[0].mxu0
    %v329 = vadd.f32 0.0, %v328
    %v330 = vpop.f32.mrb[0].mxu0
    %331 = vdwg.mxu0
    %v332 = vmul.f32 %v329, 0.25
    %vm333 = vcmask 64512
    %v334 = vsel %vm333, %v332, -inf
    %335 = vmax.xlane.f32.xlu0 %v334
    %v336 = vpop.xlane.xlu0 %335
    %v337 = vsub.f32 %v332, %v336
    %v338 = vmul.f32 %v337, 1.442695
    %v339 = vpow.pop %v338
    %v340 = vsel %vm333, %v339, 0.0
    %341 = vadd.xlane.f32.xlu0 %v340
    %v342 = vpop.xlane.xlu0 %341
    %v343 = vrcp.pop %v342
    %v344 = vmul.f32 %v339, %v343
    %v346 = vsel %vm333, %v344, 0
    %348 = vmatprep.subr.mxu0 0.0
    %349 = vmatpush1.msra.mxu0 %v252
    %350 = vmatprep.subr.mxu0 0.0
    %351 = vmatpush1.msra.mxu0 0.0
    %352 = vmatprep.subr.mxu0 0.0
    %353 = vmatpush1.msra.mxu0 0.0
    %354 = vmatprep.subr.mxu0 0.0
    %355 = vmatpush1.msra.mxu0 0.0
    %356 = vmatprep.subr.mxu0 0.0
    %357 = vmatpush1.msra.mxu0 0.0
    %358 = vmatprep.subr.mxu0 0.0
    %359 = vmatpush1.msra.mxu0 0.0
    %360 = vmatprep.subr.mxu0 0.0
    %361 = vmatpush1.msra.mxu0 0.0
    %362 = vmatprep.subr.mxu0 0.0
    %363 = vmatpush1.msra.mxu0 0.0
    %364 = vmatprep.subr.mxu0 0.0
    %365 = vmatpush1.msra.mxu0 0.0
    %366 = vmatprep.subr.mxu0 0.0
    %367 = vmatpush1.msra.mxu0 0.0
    %368 = vmatprep.subr.mxu0 0.0
    %369 = vmatpush1.msra.mxu0 0.0
    %370 = vmatprep.subr.mxu0 0.0
    %371 = vmatpush1.msra.mxu0 0.0
    %372 = vmatprep.subr.mxu0 0.0
    %373 = vmatpush1.msra.mxu0 0.0
    %374 = vmatprep.subr.mxu0 0.0
    %375 = vmatpush1.msra.mxu0 0.0
    %376 = vmatprep.subr.mxu0 0.0
    %377 = vmatpush1.msra.mxu0 0.0
    %378 = vmatprep.subr.mxu0 0.0
    %379 = vmatpush1.msra.mxu0 0.0
    %380 = vmatprep.subr.mxu0 0.0
    %381 = vmatpush1.msra.mxu0 0.0
    %382 = vmatprep.subr.mxu0 0.0
    %383 = vmatpush1.msra.mxu0 0.0
    %384 = vmatprep.subr.mxu0 0.0
    %385 = vmatpush1.msra.mxu0 0.0
    %386 = vmatprep.subr.mxu0 0.0
    %387 = vmatpush1.msra.mxu0 0.0
    %388 = vmatprep.subr.mxu0 0.0
    %389 = vmatpush1.msra.mxu0 0.0
    %390 = vmatprep.subr.mxu0 0.0
    %391 = vmatpush1.msra.mxu0 0.0
    %392 = vmatprep.subr.mxu0 0.0
    %393 = vmatpush1.msra.mxu0 0.0
    %394 = vmatprep.subr.mxu0 0.0
    %395 = vmatpush1.msra.mxu0 0.0
    %396 = vmatprep.subr.mxu0 0.0
    %397 = vmatpush1.msra.mxu0 0.0
    %398 = vmatprep.subr.mxu0 0.0
    %399 = vmatpush1.msra.mxu0 0.0
    %400 = vmatprep.subr.mxu0 0.0
    %401 = vmatpush1.msra.mxu0 0.0
    %402 = vmatprep.subr.mxu0 0.0
    %403 = vmatpush1.msra.mxu0 0.0
    %404 = vmatprep.subr.mxu0 0.0
    %405 = vmatpush1.msra.mxu0 0.0
    %406 = vmatprep.subr.mxu0 0.0
    %407 = vmatpush1.msra.mxu0 0.0
    %408 = vmatprep.subr.mxu0 0.0
    %409 = vmatpush1.msra.mxu0 0.0
    %410 = vmatprep.subr.mxu0 0.0
    %411 = vmatpush1.msra.mxu0 0.0
    %412 = vmatprep.mubr.f32.mxu0 0.0
    %413 = vmatmul.mubr.f32.gmra.mrb[0].mxu0 %v346
    %v414 = vpop.f32.mrb[0].mxu0
    %v415 = vadd.f32 0.0, %v414
    %v416 = vpop.f32.mrb[0].mxu0
    %417 = vdwg.mxu0
    %418 = vst.msk [vmem:[#allocation2] sm:$0xff] %vm255, %v415
    %s419 = scalar_lea.vmem %s0, 8
    %v420 = vld [vmem:[%s419] sm:$0xff]
    %v422 = vsel %vm33, %v420, 0
    %424 = vmatprep.subr.mxu0 0.0
    %425 = vmatpush1.msra.mxu0 %v21
    %426 = vmatprep.subr.mxu0 0.0
    %427 = vmatpush1.msra.mxu0 %v22
    %428 = vmatprep.subr.mxu0 0.0
    %429 = vmatpush1.msra.mxu0 %v23
    %430 = vmatprep.subr.mxu0 0.0
    %431 = vmatpush1.msra.mxu0 %v24
    %432 = vmatprep.subr.mxu0 0.0
    %433 = vmatpush1.msra.mxu0 0.0
    %434 = vmatprep.subr.mxu0 0.0
    %435 = vmatpush1.msra.mxu0 0.0
    %436 = vmatprep.subr.mxu0 0.0
    %437 = vmatpush1.msra.mxu0 0.0
    %438 = vmatprep.subr.mxu0 0.0
    %439 = vmatpush1.msra.mxu0 0.0
    %440 = vmatprep.subr.mxu0 0.0
    %441 = vmatpush1.msra.mxu0 0.0
    %442 = vmatprep.subr.mxu0 0.0
    %443 = vmatpush1.msra.mxu0 0.0
    %444 = vmatprep.subr.mxu0 0.0
    %445 = vmatpush1.msra.mxu0 0.0
    %446 = vmatprep.subr.mxu0 0.0
    %447 = vmatpush1.msra.mxu0 0.0
    %448 = vmatprep.subr.mxu0 0.0
    %449 = vmatpush1.msra.mxu0 0.0
    %450 = vmatprep.subr.mxu0 0.0
    %451 = vmatpush1.msra.mxu0 0.0
    %452 = vmatprep.subr.mxu0 0.0
    %453 = vmatpush1.msra.mxu0 0.0
    %454 = vmatprep.subr.mxu0 0.0
    %455 = vmatpush1.msra.mxu0 0.0
    %456 = vmatprep.subr.mxu0 0.0
    %457 = vmatpush1.msra.mxu0 0.0
    %458 = vmatprep.subr.mxu0 0.0
    %459 = vmatpush1.msra.mxu0 0.0
    %460 = vmatprep.subr.mxu0 0.0
    %461 = vmatpush1.msra.mxu0 0.0
    %462 = vmatprep.subr.mxu0 0.0
    %463 = vmatpush1.msra.mxu0 0.0
    %464 = vmatprep.subr.mxu0 0.0
    %465 = vmatpush1.msra.mxu0 0.0
    %466 = vmatprep.subr.mxu0 0.0
    %467 = vmatpush1.msra.mxu0 0.0
    %468 = vmatprep.subr.mxu0 0.0
    %469 = vmatpush1.msra.mxu0 0.0
    %470 = vmatprep.subr.mxu0 0.0
    %471 = vmatpush1.msra.mxu0 0.0
    %472 = vmatprep.subr.mxu0 0.0
    %473 = vmatpush1.msra.mxu0 0.0
    %474 = vmatprep.subr.mxu0 0.0
    %475 = vmatpush1.msra.mxu0 0.0
    %476 = vmatprep.subr.mxu0 0.0
    %477 = vmatpush1.msra.mxu0 0.0
    %478 = vmatprep.subr.mxu0 0.0
    %479 = vmatpush1.msra.mxu0 0.0
    %480 = vmatprep.subr.mxu0 0.0
    %481 = vmatpush1.msra.mxu0 0.0
    %482 = vmatprep.subr.mxu0 0.0
    %483 = vmatpush1.msra.mxu0 0.0
    %484 = vmatprep.subr.mxu0 0.0
    %485 = vmatpush1.msra.mxu0 0.0
    %486 = vmatprep.subr.mxu0 0.0
    %487 = vmatpush1.msra.mxu0 0.0
    %488 = vmatprep.mubr.f32.mxu0 0.0
    %489 = vmatmul.mubr.f32.gmra.mrb[0].mxu0 %v422
    %v490 = vpop.f32.mrb[0].mxu0
    %v491 = vadd.f32 %v31, %v490
    %v492 = vpop.f32.mrb[0].mxu0
    %493 = vdwg.mxu0
    %s494 = scalar_lea.vmem %s1, 8
    %v495 = vld [vmem:[%s494] sm:$0xff]
    %v497 = vsel %vm33, %v495, 0
    %499 = vmatprep.subr.mxu0 0.0
    %500 = vmatpush1.msra.mxu0 %v21
    %501 = vmatprep.subr.mxu0 0.0
    %502 = vmatpush1.msra.mxu0 %v22
    %503 = vmatprep.subr.mxu0 0.0
    %504 = vmatpush1.msra.mxu0 %v23
    %505 = vmatprep.subr.mxu0 0.0
    %506 = vmatpush1.msra.mxu0 %v24
    %507 = vmatprep.subr.mxu0 0.0
    %508 = vmatpush1.msra.mxu0 0.0
    %509 = vmatprep.subr.mxu0 0.0
    %510 = vmatpush1.msra.mxu0 0.0
    %511 = vmatprep.subr.mxu0 0.0
    %512 = vmatpush1.msra.mxu0 0.0
    %513 = vmatprep.subr.mxu0 0.0
    %514 = vmatpush1.msra.mxu0 0.0
    %515 = vmatprep.subr.mxu0 0.0
    %516 = vmatpush1.msra.mxu0 0.0
    %517 = vmatprep.subr.mxu0 0.0
    %518 = vmatpush1.msra.mxu0 0.0
    %519 = vmatprep.subr.mxu0 0.0
    %520 = vmatpush1.msra.mxu0 0.0
    %521 = vmatprep.subr.mxu0 0.0
    %522 = vmatpush1.msra.mxu0 0.0
    %523 = vmatprep.subr.mxu0 0.0
    %524 = vmatpush1.msra.mxu0 0.0
    %525 = vmatprep.subr.mxu0 0.0
    %526 = vmatpush1.msra.mxu0 0.0
    %527 = vmatprep.subr.mxu0 0.0
    %528 = vmatpush1.msra.mxu0 0.0
    %529 = vmatprep.subr.mxu0 0.0
    %530 = vmatpush1.msra.mxu0 0.0
    %531 = vmatprep.subr.mxu0 0.0
    %532 = vmatpush1.msra.mxu0 0.0
    %533 = vmatprep.subr.mxu0 0.0
    %534 = vmatpush1.msra.mxu0 0.0
    %535 = vmatprep.subr.mxu0 0.0
    %536 = vmatpush1.msra.mxu0 0.0
    %537 = vmatprep.subr.mxu0 0.0
    %538 = vmatpush1.msra.mxu0 0.0
    %539 = vmatprep.subr.mxu0 0.0
    %540 = vmatpush1.msra.mxu0 0.0
    %541 = vmatprep.subr.mxu0 0.0
    %542 = vmatpush1.msra.mxu0 0.0
    %543 = vmatprep.subr.mxu0 0.0
    %544 = vmatpush1.msra.mxu0 0.0
    %545 = vmatprep.subr.mxu0 0.0
    %546 = vmatpush1.msra.mxu0 0.0
    %547 = vmatprep.subr.mxu0 0.0
    %548 = vmatpush1.msra.mxu0 0.0
    %549 = vmatprep.subr.mxu0 0.0
    %550 = vmatpush1.msra.mxu0 0.0
    %551 = vmatprep.subr.mxu0 0.0
    %552 = vmatpush1.msra.mxu0 0.0
    %553 = vmatprep.subr.mxu0 0.0
    %554 = vmatpush1.msra.mxu0 0.0
    %555 = vmatprep.subr.mxu0 0.0
    %556 = vmatpush1.msra.mxu0 0.0
    %557 = vmatprep.subr.mxu0 0.0
    %558 = vmatpush1.msra.mxu0 0.0
    %559 = vmatprep.subr.mxu0 0.0
    %560 = vmatpush1.msra.mxu0 0.0
    %561 = vmatprep.subr.mxu0 0.0
    %562 = vmatpush1.msra.mxu0 0.0
    %563 = vmatprep.mubr.f32.mxu0 0.0
    %564 = vmatmul.mubr.f32.gmra.mrb[0].mxu0 %v497
    %v565 = vpop.f32.mrb[0].mxu0
    %v566 = vadd.f32 %v31, %v565
    %v567 = vpop.f32.mrb[0].mxu0
    %568 = vdwg.mxu0
    %s569 = scalar_lea.vmem %s2, 8
    %v570 = vld [vmem:[%s569] sm:$0xff]
    %v572 = vsel %vm33, %v570, 0
    %574 = vmatprep.subr.mxu0 0.0
    %575 = vmatpush1.msra.mxu0 %v21
    %576 = vmatprep.subr.mxu0 0.0
    %577 = vmatpush1.msra.mxu0 %v22
    %578 = vmatprep.subr.mxu0 0.0
    %579 = vmatpush1.msra.mxu0 %v23
    %580 = vmatprep.subr.mxu0 0.0
    %581 = vmatpush1.msra.mxu0 %v24
    %582 = vmatprep.subr.mxu0 0.0
    %583 = vmatpush1.msra.mxu0 0.0
    %584 = vmatprep.subr.mxu0 0.0
    %585 = vmatpush1.msra.mxu0 0.0
    %586 = vmatprep.subr.mxu0 0.0
    %587 = vmatpush1.msra.mxu0 0.0
    %588 = vmatprep.subr.mxu0 0.0
    %589 = vmatpush1.msra.mxu0 0.0
    %590 = vmatprep.subr.mxu0 0.0
    %591 = vmatpush1.msra.mxu0 0.0
    %592 = vmatprep.subr.mxu0 0.0
    %593 = vmatpush1.msra.mxu0 0.0
    %594 = vmatprep.subr.mxu0 0.0
    %595 = vmatpush1.msra.mxu0 0.0
    %596 = vmatprep.subr.mxu0 0.0
    %597 = vmatpush1.msra.mxu0 0.0
    %598 = vmatprep.subr.mxu0 0.0
    %599 = vmatpush1.msra.mxu0 0.0
    %600 = vmatprep.subr.mxu0 0.0
    %601 = vmatpush1.msra.mxu0 0.0
    %602 = vmatprep.subr.mxu0 0.0
    %603 = vmatpush1.msra.mxu0 0.0
    %604 = vmatprep.subr.mxu0 0.0
    %605 = vmatpush1.msra.mxu0 0.0
    %606 = vmatprep.subr.mxu0 0.0
    %607 = vmatpush1.msra.mxu0 0.0
    %608 = vmatprep.subr.mxu0 0.0
    %609 = vmatpush1.msra.mxu0 0.0
    %610 = vmatprep.subr.mxu0 0.0
    %611 = vmatpush1.msra.mxu0 0.0
    %612 = vmatprep.subr.mxu0 0.0
    %613 = vmatpush1.msra.mxu0 0.0
    %614 = vmatprep.subr.mxu0 0.0
    %615 = vmatpush1.msra.mxu0 0.0
    %616 = vmatprep.subr.mxu0 0.0
    %617 = vmatpush1.msra.mxu0 0.0
    %618 = vmatprep.subr.mxu0 0.0
    %619 = vmatpush1.msra.mxu0 0.0
    %620 = vmatprep.subr.mxu0 0.0
    %621 = vmatpush1.msra.mxu0 0.0
    %622 = vmatprep.subr.mxu0 0.0
    %623 = vmatpush1.msra.mxu0 0.0
    %624 = vmatprep.subr.mxu0 0.0
    %625 = vmatpush1.msra.mxu0 0.0
    %626 = vmatprep.subr.mxu0 0.0
    %627 = vmatpush1.msra.mxu0 0.0
    %628 = vmatprep.subr.mxu0 0.0
    %629 = vmatpush1.msra.mxu0 0.0
    %630 = vmatprep.subr.mxu0 0.0
    %631 = vmatpush1.msra.mxu0 0.0
    %632 = vmatprep.subr.mxu0 0.0
    %633 = vmatpush1.msra.mxu0 0.0
    %634 = vmatprep.subr.mxu0 0.0
    %635 = vmatpush1.msra.mxu0 0.0
    %636 = vmatprep.subr.mxu0 0.0
    %637 = vmatpush1.msra.mxu0 0.0
    %638 = vmatprep.mubr.f32.mxu0 0.0
    %639 = vmatmul.mubr.f32.gmra.mrb[0].mxu0 %v572
    %v640 = vpop.f32.mrb[0].mxu0
    %v641 = vadd.f32 %v31, %v640
    %v642 = vpop.f32.mrb[0].mxu0
    %643 = vdwg.mxu0
    %v645 = vsel %vm255, %v491, 0
    %v648 = vsel %vm255, %v566, 0
    %650 = vmatprep.subr.mxu0 0.0
    %651 = vmatpush1.xpose.msra.mxu0 %v648
    %652 = vmatprep.subr.mxu0 0.0
    %653 = vmatpush1.xpose.msra.mxu0 0.0
    %654 = vmatprep.subr.mxu0 0.0
    %655 = vmatpush1.xpose.msra.mxu0 0.0
    %656 = vmatprep.subr.mxu0 0.0
    %657 = vmatpush1.xpose.msra.mxu0 0.0
    %658 = vmatprep.subr.mxu0 0.0
    %659 = vmatpush1.xpose.msra.mxu0 0.0
    %660 = vmatprep.subr.mxu0 0.0
    %661 = vmatpush1.xpose.msra.mxu0 0.0
    %662 = vmatprep.subr.mxu0 0.0
    %663 = vmatpush1.xpose.msra.mxu0 0.0
    %664 = vmatprep.subr.mxu0 0.0
    %665 = vmatpush1.xpose.msra.mxu0 0.0
    %666 = vmatprep.subr.mxu0 0.0
    %667 = vmatpush1.xpose.msra.mxu0 0.0
    %668 = vmatprep.subr.mxu0 0.0
    %669 = vmatpush1.xpose.msra.mxu0 0.0
    %670 = vmatprep.subr.mxu0 0.0
    %671 = vmatpush1.xpose.msra.mxu0 0.0
    %672 = vmatprep.subr.mxu0 0.0
    %673 = vmatpush1.xpose.msra.mxu0 0.0
    %674 = vmatprep.subr.mxu0 0.0
    %675 = vmatpush1.xpose.msra.mxu0 0.0
    %676 = vmatprep.subr.mxu0 0.0
    %677 = vmatpush1.xpose.msra.mxu0 0.0
    %678 = vmatprep.subr.mxu0 0.0
    %679 = vmatpush1.xpose.msra.mxu0 0.0
    %680 = vmatprep.subr.mxu0 0.0
    %681 = vmatpush1.xpose.msra.mxu0 0.0
    %682 = vmatprep.subr.mxu0 0.0
    %683 = vmatpush1.xpose.msra.mxu0 0.0
    %684 = vmatprep.subr.mxu0 0.0
    %685 = vmatpush1.xpose.msra.mxu0 0.0
    %686 = vmatprep.subr.mxu0 0.0
    %687 = vmatpush1.xpose.msra.mxu0 0.0
    %688 = vmatprep.subr.mxu0 0.0
    %689 = vmatpush1.xpose.msra.mxu0 0.0
    %690 = vmatprep.subr.mxu0 0.0
    %691 = vmatpush1.xpose.msra.mxu0 0.0
    %692 = vmatprep.subr.mxu0 0.0
    %693 = vmatpush1.xpose.msra.mxu0 0.0
    %694 = vmatprep.subr.mxu0 0.0
    %695 = vmatpush1.xpose.msra.mxu0 0.0
    %696 = vmatprep.subr.mxu0 0.0
    %697 = vmatpush1.xpose.msra.mxu0 0.0
    %698 = vmatprep.subr.mxu0 0.0
    %699 = vmatpush1.xpose.msra.mxu0 0.0
    %700 = vmatprep.subr.mxu0 0.0
    %701 = vmatpush1.xpose.msra.mxu0 0.0
    %702 = vmatprep.subr.mxu0 0.0
    %703 = vmatpush1.xpose.msra.mxu0 0.0
    %704 = vmatprep.subr.mxu0 0.0
    %705 = vmatpush1.xpose.msra.mxu0 0.0
    %706 = vmatprep.subr.mxu0 0.0
    %707 = vmatpush1.xpose.msra.mxu0 0.0
    %708 = vmatprep.subr.mxu0 0.0
    %709 = vmatpush1.xpose.msra.mxu0 0.0
    %710 = vmatprep.subr.mxu0 0.0
    %711 = vmatpush1.xpose.msra.mxu0 0.0
    %712 = vmatprep.subr.mxu0 0.0
    %713 = vmatpush1.xpose.msra.mxu0 0.0
    %714 = vmatprep.mubr.f32.mxu0 0.0
    %715 = vmatmul.mubr.f32.gmra.mrb[0].mxu0 %v645
    %v716 = vpop.f32.mrb[0].mxu0
    %v717 = vadd.f32 0.0, %v716
    %v718 = vpop.f32.mrb[0].mxu0
    %719 = vdwg.mxu0
    %v720 = vmul.f32 %v717, 0.25
    %v721 = vsel %vm333, %v720, -inf
    %722 = vmax.xlane.f32.xlu0 %v721
    %v723 = vpop.xlane.xlu0 %722
    %v724 = vsub.f32 %v720, %v723
    %v725 = vmul.f32 %v724, 1.442695
    %v726 = vpow.pop %v725
    %v727 = vsel %vm333, %v726, 0.0
    %728 = vadd.xlane.f32.xlu0 %v727
    %v729 = vpop.xlane.xlu0 %728
    %v730 = vrcp.pop %v729
    %v731 = vmul.f32 %v726, %v730
    %v733 = vsel %vm333, %v731, 0
    %735 = vmatprep.subr.mxu0 0.0
    %736 = vmatpush1.msra.mxu0 %v641
    %737 = vmatprep.subr.mxu0 0.0
    %738 = vmatpush1.msra.mxu0 0.0
    %739 = vmatprep.subr.mxu0 0.0
    %740 = vmatpush1.msra.mxu0 0.0
    %741 = vmatprep.subr.mxu0 0.0
    %742 = vmatpush1.msra.mxu0 0.0
    %743 = vmatprep.subr.mxu0 0.0
    %744 = vmatpush1.msra.mxu0 0.0
    %745 = vmatprep.subr.mxu0 0.0
    %746 = vmatpush1.msra.mxu0 0.0
    %747 = vmatprep.subr.mxu0 0.0
    %748 = vmatpush1.msra.mxu0 0.0
    %749 = vmatprep.subr.mxu0 0.0
    %750 = vmatpush1.msra.mxu0 0.0
    %751 = vmatprep.subr.mxu0 0.0
    %752 = vmatpush1.msra.mxu0 0.0
    %753 = vmatprep.subr.mxu0 0.0
    %754 = vmatpush1.msra.mxu0 0.0
    %755 = vmatprep.subr.mxu0 0.0
    %756 = vmatpush1.msra.mxu0 0.0
    %757 = vmatprep.subr.mxu0 0.0
    %758 = vmatpush1.msra.mxu0 0.0
    %759 = vmatprep.subr.mxu0 0.0
    %760 = vmatpush1.msra.mxu0 0.0
    %761 = vmatprep.subr.mxu0 0.0
    %762 = vmatpush1.msra.mxu0 0.0
    %763 = vmatprep.subr.mxu0 0.0
    %764 = vmatpush1.msra.mxu0 0.0
    %765 = vmatprep.subr.mxu0 0.0
    %766 = vmatpush1.msra.mxu0 0.0
    %767 = vmatprep.subr.mxu0 0.0
    %768 = vmatpush1.msra.mxu0 0.0
    %769 = vmatprep.subr.mxu0 0.0
    %770 = vmatpush1.msra.mxu0 0.0
    %771 = vmatprep.subr.mxu0 0.0
    %772 = vmatpush1.msra.mxu0 0.0
    %773 = vmatprep.subr.mxu0 0.0
    %774 = vmatpush1.msra.mxu0 0.0
    %775 = vmatprep.subr.mxu0 0.0
    %776 = vmatpush1.msra.mxu0 0.0
    %777 = vmatprep.subr.mxu0 0.0
    %778 = vmatpush1.msra.mxu0 0.0
    %779 = vmatprep.subr.mxu0 0.0
    %780 = vmatpush1.msra.mxu0 0.0
    %781 = vmatprep.subr.mxu0 0.0
    %782 = vmatpush1.msra.mxu0 0.0
    %783 = vmatprep.subr.mxu0 0.0
    %784 = vmatpush1.msra.mxu0 0.0
    %785 = vmatprep.subr.mxu0 0.0
    %786 = vmatpush1.msra.mxu0 0.0
    %787 = vmatprep.subr.mxu0 0.0
    %788 = vmatpush1.msra.mxu0 0.0
    %789 = vmatprep.subr.mxu0 0.0
    %790 = vmatpush1.msra.mxu0 0.0
    %791 = vmatprep.subr.mxu0 0.0
    %792 = vmatpush1.msra.mxu0 0.0
    %793 = vmatprep.subr.mxu0 0.0
    %794 = vmatpush1.msra.mxu0 0.0
    %795 = vmatprep.subr.mxu0 0.0
    %796 = vmatpush1.msra.mxu0 0.0
    %797 = vmatprep.subr.mxu0 0.0
    %798 = vmatpush1.msra.mxu0 0.0
    %799 = vmatprep.mubr.f32.mxu0 0.0
    %800 = vmatmul.mubr.f32.gmra.mrb[0].mxu0 %v733
    %v801 = vpop.f32.mrb[0].mxu0
    %v802 = vadd.f32 0.0, %v801
    %v803 = vpop.f32.mrb[0].mxu0
    %804 = vdwg.mxu0
    %s805 = scalar_lea.vmem [#allocation2], 8
    %806 = vst.msk [vmem:[%s805] sm:$0xff] %vm255, %v802
    // Predicated region
    $region22: #{tpu_custom_call.1} parent=1 // pred_check
      _
    $region23: #{tpu_custom_call.1} parent=1 // pred_check_branch
      %808 = sbr.rel (0) target = $region25
    $region24: #{tpu_custom_call.1} parent=1 // pred_region
      %s810 = ssub.s32 256, 256
      %811 = vsyncadd [#allocation3], %s810
      %s812 = sshll.u32 [#allocation2], 4
      %s813 = int_to_ptr.vmem [resolvable:$true] %s812
      %818 = dma.vmem_to_hbm [thread:$0]  %s813, 256, %s5, [#allocation3], 128, 128, 8
    $region25: #{tpu_custom_call.1} parent=1 // pred_fallthru
      _
    // Predicated region
    $region26: #{tpu_custom_call.1} parent=1 // pred_check
      _
    $region27: #{tpu_custom_call.1} parent=1 // pred_check_branch
      %820 = sbr.rel (0) target = $region29
    $region28: #{tpu_custom_call.1} parent=1 // pred_region
      %821 = dma.done [#allocation3], 256
    $region29: #{tpu_custom_call.1} parent=1 // pred_fallthru
      _
    %822 = vsyncpa [#allocation3], 1

</llo_original>
